<compile_context>
chip_gen: v6e
topology: v6e:2x2x1
jax: 0.10.0
libtpu: 0.0.40
codegen_flags: <defaults>
</compile_context>

<pallas_src>
import functools

import jax
import jax.numpy as jnp
from jax.experimental import pallas as pl
from jax.experimental.pallas import tpu as pltpu


def _layer_norm_f32(y, g, b, eps):
    """Single-pass LayerNorm over the last axis; y is f32."""
    inv_d = 1.0 / y.shape[-1]
    s1 = jnp.sum(y, axis=-1, keepdims=True)
    s2 = jnp.sum(y * y, axis=-1, keepdims=True)
    mean = s1 * inv_d
    var = jnp.maximum(s2 * inv_d - mean * mean, 0.0)
    inv = jax.lax.rsqrt(var + eps)          # EUP rsqrt
    return (y - mean) * inv * g + b


def _ffn_kernel_resident(x_ref, w1_ref, w2_ref, g_ref, b_ref, o_ref, *, eps):
    """Weights fully resident in VMEM; grid is (token_tiles,) only."""
    x = x_ref[...]            # (tm, d_model)
    w1 = w1_ref[...]          # (d_inner, d_model)
    w2 = w2_ref[...]          # (d_model, d_inner)

    # h = relu(x @ W1^T): contract last axes of both -> no explicit transpose.
    h = jax.lax.dot_general(
        x, w1, (((1,), (1,)), ((), ())), preferred_element_type=jnp.float32)
    h = jnp.maximum(h, 0.0)

    # y = h @ W2^T (+ residual).  Inter-matmul activation kept in weight dtype.
    y = jax.lax.dot_general(
        h.astype(w2.dtype), w2, (((1,), (1,)), ((), ())),
        preferred_element_type=jnp.float32)
    y = y + x.astype(jnp.float32)

    # dropout == identity (eval); LayerNorm over d_model.
    out = _layer_norm_f32(y, g_ref[...], b_ref[...], eps)
    o_ref[...] = out.astype(o_ref.dtype)


def _ffn_kernel_tiled(x_ref, w1_ref, w2_ref, g_ref, b_ref, o_ref, acc_ref,
                      *, eps):
    """Fallback: d_inner reduction tiled over the last ('arbitrary') grid axis."""
    k = pl.program_id(1)

    @pl.when(k == 0)
    def _():
        acc_ref[...] = jnp.zeros_like(acc_ref)

    x = x_ref[...]            # (tm, d_model)
    w1 = w1_ref[...]          # (tk, d_model)   slice of W1 [d_inner, d_model]
    w2 = w2_ref[...]          # (d_model, tk)   slice of W2 [d_model, d_inner]

    h = jax.lax.dot_general(
        x, w1, (((1,), (1,)), ((), ())), preferred_element_type=jnp.float32)
    h = jnp.maximum(h, 0.0)

    acc_ref[...] += jax.lax.dot_general(
        h.astype(w2.dtype), w2, (((1,), (1,)), ((), ())),
        preferred_element_type=jnp.float32)

    @pl.when(k == pl.num_programs(1) - 1)
    def _():
        y = acc_ref[...] + x.astype(jnp.float32)
        out = _layer_norm_f32(y, g_ref[...], b_ref[...], eps)
        o_ref[...] = out.astype(o_ref.dtype)


def positionwise_ff(x, w1, w2, gamma, beta, *, eps=1e-5,
                    block_tokens=512, block_inner=512,
                    compute_dtype=None, vmem_budget_bytes=None):
    """Fused FFN + residual + LayerNorm.

    x: [B, L, d_model]; w1: [d_inner, d_model]; w2: [d_model, d_inner].

    Precision policy: if compute_dtype is given (e.g. jnp.bfloat16), x/w1/w2
    are cast once in the wrapper; both matmuls accumulate in f32 on the MXU,
    the inter-matmul activation is kept in the weight dtype, LayerNorm runs in
    f32, and the output is cast back to x's original dtype.
    """
    B, L, d_model = x.shape
    d_inner, dm1 = w1.shape
    dm2, di2 = w2.shape
    assert dm1 == d_model and dm2 == d_model and di2 == d_inner

    out_dtype = x.dtype
    if compute_dtype is not None:
        x = x.astype(compute_dtype)
        w1 = w1.astype(compute_dtype)
        w2 = w2.astype(compute_dtype)
    g2 = gamma.reshape(1, d_model).astype(jnp.float32)
    b2 = beta.reshape(1, d_model).astype(jnp.float32)

    N = B * L
    x2 = x.reshape(N, d_model)
    x_item = jnp.dtype(x2.dtype).itemsize
    w_item = jnp.dtype(w1.dtype).itemsize
    o_item = jnp.dtype(out_dtype).itemsize

    # ---- Token-tile selection: cap at block_tokens, but produce >= 2 token
    # tiles whenever N allows so the "parallel" axis shards across both TCs.
    if N <= 8:
        tm = N
    else:
        tm = min(block_tokens, N)
        if pl.cdiv(N, tm) < 2:
            tm = ((((N + 1) // 2) + 7) // 8) * 8
    grid_tokens = pl.cdiv(N, tm)

    # ---- Decide resident-weight path vs. tiled-reduction fallback (VMEM est.)
    w_bytes = (w1.size + w2.size) * w_item
    io_bytes = 2 * tm * d_model * (2 * x_item + 2 * o_item)   # x + out, dbl-buf
    tmp_bytes = tm * d_inner * 4 + 2 * tm * d_model * 4        # h, y temps
    resident_est = 2 * w_bytes + io_bytes + tmp_bytes          # 2x weights: safe
    budget = (48 * 1024 * 1024) if vmem_budget_bytes is None else vmem_budget_bytes
    use_resident = resident_est <= budget

    if use_resident:
        vmem_limit = int(min(64 * 1024 * 1024,
                             max(32 * 1024 * 1024, resident_est + (8 << 20))))
        out2 = pl.pallas_call(
            functools.partial(_ffn_kernel_resident, eps=float(eps)),
            out_shape=jax.ShapeDtypeStruct((N, d_model), out_dtype),
            grid_spec=pltpu.PrefetchScalarGridSpec(
                num_scalar_prefetch=0,
                grid=(grid_tokens,),
                in_specs=[
                    pl.BlockSpec((tm, d_model), lambda i: (i, 0)),        # x tile
                    pl.BlockSpec((d_inner, d_model), lambda i: (0, 0)),   # W1 (resident)
                    pl.BlockSpec((d_model, d_inner), lambda i: (0, 0)),   # W2 (resident)
                    pl.BlockSpec((1, d_model), lambda i: (0, 0)),         # gamma
                    pl.BlockSpec((1, d_model), lambda i: (0, 0)),         # beta
                ],
                out_specs=pl.BlockSpec((tm, d_model), lambda i: (i, 0)),
            ),
            compiler_params=pltpu.CompilerParams(
                dimension_semantics=("parallel",),
                vmem_limit_bytes=vmem_limit),
        )(x2, w1, w2, g2, b2)
    else:
        # Reduction tiling over d_inner: pick tk as the largest multiple of
        # 128 <= block_inner that divides d_inner (else full d_inner).
        tk = min(block_inner, d_inner)
        tk = max(128, (tk // 128) * 128)
        while d_inner % tk != 0 and tk > 128:
            tk -= 128
        if d_inner % tk != 0:
            tk = d_inner   # TODO(synk): ragged d_inner falls back to full width

        tiled_est = (2 * tm * d_model * (2 * x_item + 2 * o_item)
                     + 2 * 2 * tk * d_model * w_item    # W1/W2 chunks, dbl-buf
                     + tm * d_model * 4                 # acc scratch
                     + tm * tk * 4)                     # h temp
        vmem_limit = int(min(64 * 1024 * 1024,
                             max(32 * 1024 * 1024, tiled_est + (8 << 20))))
        out2 = pl.pallas_call(
            functools.partial(_ffn_kernel_tiled, eps=float(eps)),
            out_shape=jax.ShapeDtypeStruct((N, d_model), out_dtype),
            grid_spec=pltpu.PrefetchScalarGridSpec(
                num_scalar_prefetch=0,
                grid=(grid_tokens, d_inner // tk),
                in_specs=[
                    pl.BlockSpec((tm, d_model), lambda i, k: (i, 0)),     # x tile
                    pl.BlockSpec((tk, d_model), lambda i, k: (k, 0)),     # W1 chunk
                    pl.BlockSpec((d_model, tk), lambda i, k: (0, k)),     # W2 chunk
                    pl.BlockSpec((1, d_model), lambda i, k: (0, 0)),      # gamma
                    pl.BlockSpec((1, d_model), lambda i, k: (0, 0)),      # beta
                ],
                out_specs=pl.BlockSpec((tm, d_model), lambda i, k: (i, 0)),
                scratch_shapes=[pltpu.VMEM((tm, d_model), jnp.float32)],
            ),
            compiler_params=pltpu.CompilerParams(
                dimension_semantics=("parallel", "arbitrary"),
                vmem_limit_bytes=vmem_limit),
        )(x2, w1, w2, g2, b2)

    return out2.reshape(B, L, d_model)


def _reference(x, w1, w2, gamma, beta, eps=1e-5):
    h = jnp.maximum(jnp.einsum("bld,id->bli", x, w1), 0.0)
    y = jnp.einsum("bli,di->bld", h, w2) + x
    mean = jnp.mean(y, axis=-1, keepdims=True)
    var = jnp.mean((y - mean) ** 2, axis=-1, keepdims=True)
    return (y - mean) * jax.lax.rsqrt(var + eps) * gamma + beta


if __name__ == "__main__":
    # hparams: d_model=128, d_inner=256, dropout inactive at inference,
    # init uniform(-init_range, init_range) with init_range=0.1.
    B, L, d_model, d_inner = 2, 8, 128, 256
    init_range = 0.1

    key = jax.random.PRNGKey(0)
    kx, k1, k2 = jax.random.split(key, 3)
    x = jax.random.normal(kx, (B, L, d_model), dtype=jnp.float32)
    w1 = jax.random.uniform(k1, (d_inner, d_model), jnp.float32,
                            -init_range, init_range)
    w2 = jax.random.uniform(k2, (d_model, d_inner), jnp.float32,
                            -init_range, init_range)
    gamma = jnp.ones((d_model,), jnp.float32)   # LayerNorm default weight
    beta = jnp.zeros((d_model,), jnp.float32)   # LayerNorm default bias

    ref = _reference(x, w1, w2, gamma, beta)

    # 1) f32 path: resident weights, 2 token tiles (megacore-friendly grid).
    out = jax.block_until_ready(positionwise_ff(x, w1, w2, gamma, beta))
    assert out.shape == (B, L, d_model)
    assert jnp.allclose(out, ref, atol=1e-4, rtol=1e-4), "f32 path mismatch"

    # 2) bf16 compute policy (bf16 matmuls, f32 accumulation + f32 LayerNorm).
    out_bf16 = jax.block_until_ready(
        positionwise_ff(x, w1, w2, gamma, beta, compute_dtype=jnp.bfloat16))
    assert jnp.allclose(out_bf16, ref, atol=5e-2, rtol=5e-2), "bf16 path mismatch"

    # 3) Partial last token tile (N % tm != 0) -> masked output writeback.
    xp = jax.random.normal(kx, (1, 20, d_model), dtype=jnp.float32)
    refp = _reference(xp, w1, w2, gamma, beta)
    outp = jax.block_until_ready(
        positionwise_ff(xp, w1, w2, gamma, beta, block_tokens=16))
    assert jnp.allclose(outp, refp, atol=1e-4, rtol=1e-4), "partial-tile mismatch"

    # 4) Tiled-reduction fallback (force tiny budget so weights stream over k).
    outt = jax.block_until_ready(
        positionwise_ff(x, w1, w2, gamma, beta, block_inner=128,
                        vmem_budget_bytes=1))
    assert jnp.allclose(outt, ref, atol=1e-4, rtol=1e-4), "tiled path mismatch"

    print("KERNEL_OK")
</pallas_src>

<mosaic_0001>
module attributes {stable_mosaic.version = 11 : i64} {
  func.func @_ffn_kernel_resident(%arg0: i32, %arg1: memref<8x128xf32, #tpu.memory_space<vmem>>, %arg2: memref<256x128xf32, #tpu.memory_space<vmem>>, %arg3: memref<128x256xf32, #tpu.memory_space<vmem>>, %arg4: memref<1x128xf32, #tpu.memory_space<vmem>>, %arg5: memref<1x128xf32, #tpu.memory_space<vmem>>, %arg6: memref<8x128xf32, #tpu.memory_space<vmem>>) attributes {dimension_semantics = [#tpu.dimension_semantics<parallel>], iteration_bounds = array<i64: 2>, scalar_prefetch = 0 : i64, scratch_operands = 0 : i64, tpu.core_type = #tpu.core_type<tc>, window_params = [{transform_indices = @transform_0, window_bounds = array<i64: 8, 128>}, {pipeline_mode = #tpu.pipeline_mode<synchronous>, transform_indices = @transform_1, window_bounds = array<i64: 256, 128>}, {pipeline_mode = #tpu.pipeline_mode<synchronous>, transform_indices = @transform_2, window_bounds = array<i64: 128, 256>}, {pipeline_mode = #tpu.pipeline_mode<synchronous>, transform_indices = @transform_3, window_bounds = array<i64: 1, 128>}, {pipeline_mode = #tpu.pipeline_mode<synchronous>, transform_indices = @transform_4, window_bounds = array<i64: 1, 128>}, {transform_indices = @transform_5, window_bounds = array<i64: 8, 128>}]} {
    %c0 = arith.constant 0 : index
    %c0_0 = arith.constant 0 : index
    %0 = vector.load %arg1[%c0, %c0_0] : memref<8x128xf32, #tpu.memory_space<vmem>>, vector<8x128xf32>
    %c0_1 = arith.constant 0 : index
    %c0_2 = arith.constant 0 : index
    %1 = vector.load %arg2[%c0_1, %c0_2] : memref<256x128xf32, #tpu.memory_space<vmem>>, vector<256x128xf32>
    %c0_3 = arith.constant 0 : index
    %c0_4 = arith.constant 0 : index
    %2 = vector.load %arg3[%c0_3, %c0_4] : memref<128x256xf32, #tpu.memory_space<vmem>>, vector<128x256xf32>
    %cst = arith.constant dense<0.000000e+00> : vector<8x256xf32>
    %3 = tpu.matmul %0, %1, %cst {dimension_numbers = #tpu.dot_dimension_numbers<[1], [1], [0], [0], [0, 0, 1, 0], [], []>} : vector<8x128xf32>, vector<256x128xf32>, vector<8x256xf32> -> vector<8x256xf32>
    %cst_5 = arith.constant 0.000000e+00 : f32
    %4 = vector.broadcast %cst_5 : f32 to vector<8x256xf32>
    %5 = arith.maximumf %3, %4 : vector<8x256xf32>
    %cst_6 = arith.constant dense<0.000000e+00> : vector<8x128xf32>
    %6 = tpu.matmul %5, %2, %cst_6 {dimension_numbers = #tpu.dot_dimension_numbers<[1], [1], [0], [0], [0, 0, 1, 0], [], []>} : vector<8x256xf32>, vector<128x256xf32>, vector<8x128xf32> -> vector<8x128xf32>
    %7 = arith.addf %6, %0 : vector<8x128xf32>
    %c0_7 = arith.constant 0 : index
    %c0_8 = arith.constant 0 : index
    %8 = vector.load %arg4[%c0_7, %c0_8] : memref<1x128xf32, #tpu.memory_space<vmem>>, vector<1x128xf32>
    %c0_9 = arith.constant 0 : index
    %c0_10 = arith.constant 0 : index
    %9 = vector.load %arg5[%c0_9, %c0_10] : memref<1x128xf32, #tpu.memory_space<vmem>>, vector<1x128xf32>
    %cst_11 = arith.constant dense<0.000000e+00> : vector<8xf32>
    %10 = vector.multi_reduction <add>, %7, %cst_11 [1] : vector<8x128xf32> to vector<8xf32>
    %11 = vector.shape_cast %10 : vector<8xf32> to vector<8x1xf32>
    %12 = arith.mulf %7, %7 : vector<8x128xf32>
    %cst_12 = arith.constant dense<0.000000e+00> : vector<8xf32>
    %13 = vector.multi_reduction <add>, %12, %cst_12 [1] : vector<8x128xf32> to vector<8xf32>
    %14 = vector.shape_cast %13 : vector<8xf32> to vector<8x1xf32>
    %cst_13 = arith.constant 7.812500e-03 : f32
    %15 = vector.broadcast %cst_13 : f32 to vector<8x1xf32>
    %16 = arith.mulf %11, %15 : vector<8x1xf32>
    %cst_14 = arith.constant 7.812500e-03 : f32
    %17 = vector.broadcast %cst_14 : f32 to vector<8x1xf32>
    %18 = arith.mulf %14, %17 : vector<8x1xf32>
    %19 = arith.mulf %16, %16 : vector<8x1xf32>
    %20 = arith.subf %18, %19 : vector<8x1xf32>
    %cst_15 = arith.constant 0.000000e+00 : f32
    %21 = vector.broadcast %cst_15 : f32 to vector<8x1xf32>
    %22 = arith.maximumf %20, %21 : vector<8x1xf32>
    %cst_16 = arith.constant 9.99999974E-6 : f32
    %23 = vector.broadcast %cst_16 : f32 to vector<8x1xf32>
    %24 = arith.addf %22, %23 : vector<8x1xf32>
    %25 = math.rsqrt %24 : vector<8x1xf32>
    %26 = vector.broadcast %16 : vector<8x1xf32> to vector<8x128xf32>
    %27 = arith.subf %7, %26 : vector<8x128xf32>
    %28 = vector.broadcast %25 : vector<8x1xf32> to vector<8x128xf32>
    %29 = arith.mulf %27, %28 : vector<8x128xf32>
    %30 = vector.broadcast %8 : vector<1x128xf32> to vector<8x128xf32>
    %31 = arith.mulf %29, %30 : vector<8x128xf32>
    %32 = vector.broadcast %9 : vector<1x128xf32> to vector<8x128xf32>
    %33 = arith.addf %31, %32 : vector<8x128xf32>
    %c0_17 = arith.constant 0 : index
    %c0_18 = arith.constant 0 : index
    %34 = vector.load %arg6[%c0_17, %c0_18] : memref<8x128xf32, #tpu.memory_space<vmem>>, vector<8x128xf32>
    tpu.vector_store %arg6[%c0_17, %c0_18], %33 {strides = array<i32>} : memref<8x128xf32, #tpu.memory_space<vmem>>, vector<8x128xf32>,
    return
  }
  func.func @transform_0(%arg0: i32) -> (i32, i32) {
    %c0_i32 = arith.constant 0 : i32
    %c0_i32_0 = arith.constant 0 : i32
    return %arg0, %c0_i32 : i32, i32
  }
  func.func @transform_1(%arg0: i32) -> (i32, i32) {
    %c0_i32 = arith.constant 0 : i32
    %c0_i32_0 = arith.constant 0 : i32
    %c0_i32_1 = arith.constant 0 : i32
    return %c0_i32, %c0_i32_0 : i32, i32
  }
  func.func @transform_2(%arg0: i32) -> (i32, i32) {
    %c0_i32 = arith.constant 0 : i32
    %c0_i32_0 = arith.constant 0 : i32
    %c0_i32_1 = arith.constant 0 : i32
    return %c0_i32, %c0_i32_0 : i32, i32
  }
  func.func @transform_3(%arg0: i32) -> (i32, i32) {
    %c0_i32 = arith.constant 0 : i32
    %c0_i32_0 = arith.constant 0 : i32
    %c0_i32_1 = arith.constant 0 : i32
    return %c0_i32, %c0_i32_0 : i32, i32
  }
  func.func @transform_4(%arg0: i32) -> (i32, i32) {
    %c0_i32 = arith.constant 0 : i32
    %c0_i32_0 = arith.constant 0 : i32
    %c0_i32_1 = arith.constant 0 : i32
    return %c0_i32, %c0_i32_0 : i32, i32
  }
  func.func @transform_5(%arg0: i32) -> (i32, i32) {
    %c0_i32 = arith.constant 0 : i32
    %c0_i32_0 = arith.constant 0 : i32
    return %arg0, %c0_i32 : i32, i32
  }
}

</mosaic_0001>

<llo_original>
// kernel: tpu_custom_call.1
$region0: #{tpu_custom_call.1}
  #allocation0 [shape = 'u32[]', space=smem, size = 0x4, offset = 0x4, fixed_abs, tag = 'smem constant byte address 0x4 - core index']
  #allocation1 [shape = 'u32[144,128]{1,0:T(1,128)}', space=vmem, size = 0x12000, scoped, tag = 'internal scratch']
  %s0 = inlined_call_operand.hbm [shape: f32[16,128], index: 0, kind: input, shape index: {}]
  %s1 = inlined_call_operand.hbm [shape: f32[256,128], index: 1, kind: input, shape index: {}]
  %s2 = inlined_call_operand.hbm [shape: f32[128,256], index: 2, kind: input, shape index: {}]
  %s3 = inlined_call_operand.vmem [shape: f32[1,128], index: 3, kind: input, shape index: {}]
  %s4 = inlined_call_operand.vmem [shape: f32[1,128], index: 4, kind: input, shape index: {}]
  %s5 = inlined_call_operand.hbm [shape: f32[16,128], index: 5, kind: output, shape index: {}]
  %s6 = sld [smem:[#allocation0]]
  $region65: #{tpu_custom_call.1} parent=0
    _
  %s8 = ssub.s32 1, %s6
  %s9 = scalar_select 0, %s8, %s6
  $region1: #{tpu_custom_call.1} parent=0
    #allocation2 [shape = 'u8[8192]{0}', space=vmem, size = 0x2000, scoped, tag = 'input window, operand 0']
    #allocation3 [shape = 's32[2]{0}', space=sflag, size = 0x8, scoped, tag = 'scoped memory for tpu_custom_call.1']
    #allocation4 [shape = 's32[2]{0}', space=sflag, size = 0x8, scoped, tag = 'scoped memory for tpu_custom_call.1']
    #allocation5 [shape = 'u8[131072]{0}', space=vmem, size = 0x20000, scoped, tag = 'input window, operand 1, single buffered']
    #allocation6 [shape = 's32[1]{0}', space=sflag, size = 0x4, scoped, tag = 'scoped memory for tpu_custom_call.1']
    #allocation7 [shape = 'u8[131072]{0}', space=vmem, size = 0x20000, scoped, tag = 'input window, operand 2, single buffered']
    #allocation8 [shape = 'u8[8192]{0}', space=vmem, size = 0x2000, scoped, tag = 'output window, operand 0']
    %10 = vsyncpa [#allocation3], 0
    %s11 = scalar_lea.sflag [#allocation3], 1
    %12 = vsyncpa %s11, 0
    %13 = vsyncpa [#allocation6], 0
    %14 = vsyncpa [#allocation4], 0
    %s15 = scalar_lea.sflag [#allocation4], 1
    %16 = vsyncpa %s15, 0
    loop: start=0, step=1, limit=4
    $region2: #{tpu_custom_call.1} parent=1 // loop_pre_header
      _
    $region3: #{tpu_custom_call.1} parent=1 // loop_header
      %s18 = sphi 0, %s22
      %p19 = scmp.ge.s32.totalorder %s18, 4
      %s28 = sphi 0, %s30
      %s31 = sphi 0, %s28
      %s32 = sphi 0, %s31
      %s48 = sphi 0, %s32
      %s52 = sphi 0, %s52
      %s54 = sphi 0, %s52
      %s55 = sphi 0, %s54
      %s69 = sphi 0, %s55
      %s73 = sphi 0, %s73
      %s75 = sphi 0, %s73
      %s76 = sphi 0, %s75
      %s90 = sphi 0, %s76
      %s94 = sphi 0, %s94
      %s96 = sphi 0, %s94
      %s97 = sphi 0, %s96
      %s111 = sphi 0, %s97
      %s115 = sphi 0, %s115
      %s117 = sphi 0, %s115
      %s118 = sphi 0, %s117
      %s132 = sphi 0, %s118
      %s138 = sphi 0, %s140
      %s141 = sphi 0, %s138
      %s142 = sphi 0, %s141
      %s158 = sphi 0, %s142
    $region4: #{tpu_custom_call.1} parent=1 // loop_header_branch
      %21 = sbr.rel (%p19) target = $region8
    $region5: #{tpu_custom_call.1} parent=1 // loop_body
      %s23 = ssub.s32 %s18, 1
      %s24 = ssub.s32 %s18, 2
      %s25 = sadd.s32 %s18, 1
      %s26 = ssub.s32 %s18, %s25
      %p27 = scmp.eq.s32.totalorder %s26, 0
      %s29 = sadd.s32 %s28, 1
      %s30 = scalar_select %p27, %s28, %s29
      %p33 = pneg %p27
      %p34 = scmp.eq.s32.totalorder %s18, 1
      %p35 = por %p33, %p34
      %p36 = scmp.ne.s32.totalorder %s28, %s31
      %p37 = scmp.eq.s32.totalorder %s18, 0
      %p38 = por %p36, %p37
      %p39 = scmp.ne.s32.totalorder %s28, %s31
      %p40 = scmp.eq.s32.totalorder %s23, 1
      %p41 = por %p39, %p40
      %p42 = scmp.ne.s32.totalorder %s31, %s32
      %p43 = scmp.eq.s32.totalorder %s23, 0
      %p44 = por %p42, %p43
      %p45 = scmp.ne.s32.totalorder %s31, %s32
      %p46 = scmp.eq.s32.totalorder %s24, 1
      %p47 = por %p45, %p46
      %p49 = scmp.ne.s32.totalorder %s32, %s48
      %p50 = scmp.eq.s32.totalorder %s24, 0
      %p51 = por %p49, %p50
      %s53 = sadd.s32 %s52, 1
      %p56 = scmp.eq.s32.totalorder %s18, 1
      %p57 = scmp.ne.s32.totalorder %s52, %s54
      %p58 = scmp.eq.s32.totalorder %s18, 0
      %p59 = por %p57, %p58
      %p60 = scmp.ne.s32.totalorder %s52, %s54
      %p61 = scmp.eq.s32.totalorder %s23, 1
      %p62 = por %p60, %p61
      %p63 = scmp.ne.s32.totalorder %s54, %s55
      %p64 = scmp.eq.s32.totalorder %s23, 0
      %p65 = por %p63, %p64
      %p66 = scmp.ne.s32.totalorder %s54, %s55
      %p67 = scmp.eq.s32.totalorder %s24, 1
      %p68 = por %p66, %p67
      %p70 = scmp.ne.s32.totalorder %s55, %s69
      %p71 = scmp.eq.s32.totalorder %s24, 0
      %p72 = por %p70, %p71
      %s74 = sadd.s32 %s73, 1
      %p77 = scmp.eq.s32.totalorder %s18, 1
      %p78 = scmp.ne.s32.totalorder %s73, %s75
      %p79 = scmp.eq.s32.totalorder %s18, 0
      %p80 = por %p78, %p79
      %p81 = scmp.ne.s32.totalorder %s73, %s75
      %p82 = scmp.eq.s32.totalorder %s23, 1
      %p83 = por %p81, %p82
      %p84 = scmp.ne.s32.totalorder %s75, %s76
      %p85 = scmp.eq.s32.totalorder %s23, 0
      %p86 = por %p84, %p85
      %p87 = scmp.ne.s32.totalorder %s75, %s76
      %p88 = scmp.eq.s32.totalorder %s24, 1
      %p89 = por %p87, %p88
      %p91 = scmp.ne.s32.totalorder %s76, %s90
      %p92 = scmp.eq.s32.totalorder %s24, 0
      %p93 = por %p91, %p92
      %s95 = sadd.s32 %s94, 1
      %p98 = scmp.eq.s32.totalorder %s18, 1
      %p99 = scmp.ne.s32.totalorder %s94, %s96
      %p100 = scmp.eq.s32.totalorder %s18, 0
      %p101 = por %p99, %p100
      %p102 = scmp.ne.s32.totalorder %s94, %s96
      %p103 = scmp.eq.s32.totalorder %s23, 1
      %p104 = por %p102, %p103
      %p105 = scmp.ne.s32.totalorder %s96, %s97
      %p106 = scmp.eq.s32.totalorder %s23, 0
      %p107 = por %p105, %p106
      %p108 = scmp.ne.s32.totalorder %s96, %s97
      %p109 = scmp.eq.s32.totalorder %s24, 1
      %p110 = por %p108, %p109
      %p112 = scmp.ne.s32.totalorder %s97, %s111
      %p113 = scmp.eq.s32.totalorder %s24, 0
      %p114 = por %p112, %p113
      %s116 = sadd.s32 %s115, 1
      %p119 = scmp.eq.s32.totalorder %s18, 1
      %p120 = scmp.ne.s32.totalorder %s115, %s117
      %p121 = scmp.eq.s32.totalorder %s18, 0
      %p122 = por %p120, %p121
      %p123 = scmp.ne.s32.totalorder %s115, %s117
      %p124 = scmp.eq.s32.totalorder %s23, 1
      %p125 = por %p123, %p124
      %p126 = scmp.ne.s32.totalorder %s117, %s118
      %p127 = scmp.eq.s32.totalorder %s23, 0
      %p128 = por %p126, %p127
      %p129 = scmp.ne.s32.totalorder %s117, %s118
      %p130 = scmp.eq.s32.totalorder %s24, 1
      %p131 = por %p129, %p130
      %p133 = scmp.ne.s32.totalorder %s118, %s132
      %p134 = scmp.eq.s32.totalorder %s24, 0
      %p135 = por %p133, %p134
      %s136 = ssub.s32 %s18, %s25
      %p137 = scmp.eq.s32.totalorder %s136, 0
      %s139 = sadd.s32 %s138, 1
      %s140 = scalar_select %p137, %s138, %s139
      %p143 = pneg %p137
      %p144 = scmp.eq.s32.totalorder %s18, 1
      %p145 = por %p143, %p144
      %p146 = scmp.ne.s32.totalorder %s138, %s141
      %p147 = scmp.eq.s32.totalorder %s18, 0
      %p148 = por %p146, %p147
      %p149 = scmp.ne.s32.totalorder %s138, %s141
      %p150 = scmp.eq.s32.totalorder %s23, 1
      %p151 = por %p149, %p150
      %p152 = scmp.ne.s32.totalorder %s141, %s142
      %p153 = scmp.eq.s32.totalorder %s23, 0
      %p154 = por %p152, %p153
      %p155 = scmp.ne.s32.totalorder %s141, %s142
      %p156 = scmp.eq.s32.totalorder %s24, 1
      %p157 = por %p155, %p156
      %p159 = scmp.ne.s32.totalorder %s142, %s158
      %p160 = scmp.eq.s32.totalorder %s24, 0
      %p161 = por %p159, %p160
      %p162 = scmp.le.s32.totalorder 1, %s18
      %p163 = scmp.lt.s32.totalorder %s18, 3
      %p164 = pnand %p162, %p163
      %p165 = pneg %p164
      // Predicated region
      $region9: #{tpu_custom_call.1} parent=5 // pred_check
        _
      $region10: #{tpu_custom_call.1} parent=5 // pred_check_branch
        %167 = sbr.rel (%p164) target = $region12
      $region11: #{tpu_custom_call.1} parent=5 // pred_region
        %s168 = ssub.s32 %s18, 1
        // Predicated region
        $region13: #{tpu_custom_call.1} parent=11 // pred_check
          %p169 = pneg %p65
        $region14: #{tpu_custom_call.1} parent=11 // pred_check_branch
          %171 = sbr.rel (%p169) target = $region16
        $region15: #{tpu_custom_call.1} parent=11 // pred_region
          %s173 = ssub.s32 4096, 4096
          %174 = vsyncadd [#allocation6], %s173
          %s175 = sshll.u32 [#allocation5], 4
          %s176 = int_to_ptr.vmem [resolvable:$true] %s175
          %181 = dma.hbm_to_vmem [thread:$0]  %s1, 4096, %s176, [#allocation6], 128, 128, 8
        $region16: #{tpu_custom_call.1} parent=11 // pred_fallthru
          _
        // Predicated region
        $region17: #{tpu_custom_call.1} parent=11 // pred_check
          %p182 = pneg %p86
        $region18: #{tpu_custom_call.1} parent=11 // pred_check_branch
          %184 = sbr.rel (%p182) target = $region20
        $region19: #{tpu_custom_call.1} parent=11 // pred_region
          %s186 = ssub.s32 4096, 4096
          %187 = vsyncadd [#allocation6], %s186
          %s188 = sshll.u32 [#allocation7], 4
          %s189 = int_to_ptr.vmem [resolvable:$true] %s188
          %194 = dma.hbm_to_vmem [thread:$0]  %s2, 4096, %s189, [#allocation6], 256, 256, 16
        $region20: #{tpu_custom_call.1} parent=11 // pred_fallthru
          _
        // Predicated region
        $region21: #{tpu_custom_call.1} parent=11 // pred_check
          %p195 = pneg %p107
        $region22: #{tpu_custom_call.1} parent=11 // pred_check_branch
          %197 = sbr.rel (%p195) target = $region24
        $region23: #{tpu_custom_call.1} parent=11 // pred_region
          _
        $region24: #{tpu_custom_call.1} parent=11 // pred_fallthru
          _
        // Predicated region
        $region25: #{tpu_custom_call.1} parent=11 // pred_check
          %p198 = pneg %p128
        $region26: #{tpu_custom_call.1} parent=11 // pred_check_branch
          %200 = sbr.rel (%p198) target = $region28
        $region27: #{tpu_custom_call.1} parent=11 // pred_region
          _
        $region28: #{tpu_custom_call.1} parent=11 // pred_fallthru
          _
      $region12: #{tpu_custom_call.1} parent=5 // pred_fallthru
        _
      %p201 = scmp.lt.s32.totalorder %s18, 2
      // Predicated region
      $region29: #{tpu_custom_call.1} parent=5 // pred_check
        %p202 = pneg %p201
      $region30: #{tpu_custom_call.1} parent=5 // pred_check_branch
        %204 = sbr.rel (%p202) target = $region32
      $region31: #{tpu_custom_call.1} parent=5 // pred_region
        // Predicated region
        $region33: #{tpu_custom_call.1} parent=31 // pred_check
          %p205 = pneg %p38
        $region34: #{tpu_custom_call.1} parent=31 // pred_check_branch
          %207 = sbr.rel (%p205) target = $region36
        $region35: #{tpu_custom_call.1} parent=31 // pred_region
          %s208 = sand.u32 %s28, 1
          %s209 = scalar_lea.sflag [#allocation3], %s208
          %s210 = sand.u32 %s28, 1
          %s211 = smul.addr %s210, 8
          %s212 = scalar_lea.vmem [#allocation2], %s211
          %s214 = ssub.s32 128, 128
          %215 = vsyncadd %s209, %s214
          %s216 = smul.addr %s18, 128
          %s217 = scalar_lea.hbm %s0, %s216
          %s219 = sshll.u32 %s212, 4
          %s220 = int_to_ptr.vmem [resolvable:$true] %s219
          %222 = dma.hbm_to_vmem [thread:$0]  %s217, 128, %s220, %s209
        $region36: #{tpu_custom_call.1} parent=31 // pred_fallthru
          _
      $region32: #{tpu_custom_call.1} parent=5 // pred_fallthru
        _
      %p223 = scmp.le.s32.totalorder 1, %s18
      %p224 = scmp.lt.s32.totalorder %s18, 3
      %p225 = pnand %p223, %p224
      %p226 = pneg %p225
      // Predicated region
      $region37: #{tpu_custom_call.1} parent=5 // pred_check
        _
      $region38: #{tpu_custom_call.1} parent=5 // pred_check_branch
        %228 = sbr.rel (%p225) target = $region40
      $region39: #{tpu_custom_call.1} parent=5 // pred_region
        %s229 = ssub.s32 %s18, 1
        %s230 = sand.u32 %s31, 1
        %s231 = scalar_lea.sflag [#allocation3], %s230
        %s232 = sand.u32 %s31, 1
        %s233 = smul.addr %s232, 8
        %s234 = scalar_lea.vmem [#allocation2], %s233
        // Predicated region
        $region41: #{tpu_custom_call.1} parent=39 // pred_check
          %p235 = pneg %p44
        $region42: #{tpu_custom_call.1} parent=39 // pred_check_branch
          %237 = sbr.rel (%p235) target = $region44
        $region43: #{tpu_custom_call.1} parent=39 // pred_region
          %238 = dma.done %s231, 128
        $region44: #{tpu_custom_call.1} parent=39 // pred_fallthru
          _
        // Predicated region
        $region45: #{tpu_custom_call.1} parent=39 // pred_check
          %p239 = pneg %p65
        $region46: #{tpu_custom_call.1} parent=39 // pred_check_branch
          %241 = sbr.rel (%p239) target = $region48
        $region47: #{tpu_custom_call.1} parent=39 // pred_region
          %242 = dma.done [#allocation6], 4096
        $region48: #{tpu_custom_call.1} parent=39 // pred_fallthru
          _
        // Predicated region
        $region49: #{tpu_custom_call.1} parent=39 // pred_check
          %p243 = pneg %p86
        $region50: #{tpu_custom_call.1} parent=39 // pred_check_branch
          %245 = sbr.rel (%p243) target = $region52
        $region51: #{tpu_custom_call.1} parent=39 // pred_region
          %246 = dma.done [#allocation6], 4096
        $region52: #{tpu_custom_call.1} parent=39 // pred_fallthru
          _
        %s247 = sand.u32 %s31, 1
        %s248 = scalar_lea.sflag [#allocation3], %s247
        %s249 = sand.u32 %s31, 1
        %s250 = smul.addr %s249, 8
        %s251 = scalar_lea.vmem [#allocation2], %s250
        %p252 = pneg %p44
        %p253 = pneg %p41
        %p254 = pneg %p65
        %p255 = pneg %p62
        %p256 = pneg %p86
        %p257 = pneg %p83
        %p258 = pneg %p107
        %p259 = pneg %p104
        %p260 = pneg %p128
        %p261 = pneg %p125
        %p262 = pneg %p154
        %p263 = pneg %p151
        %s264 = sand.u32 %s141, 1
        %s265 = scalar_lea.sflag [#allocation4], %s264
        %s266 = sand.u32 %s141, 1
        %s267 = smul.addr %s266, 8
        %s268 = scalar_lea.vmem [#allocation8], %s267
        %v269 = vld [vmem:[%s234] sm:$0xff]
        %v270 = vld [vmem:[#allocation5] sm:$0xff]
        %v271 = vld [vmem:[#allocation5 + $0x8] sm:$0xff]
        %v272 = vld [vmem:[#allocation5 + $0x10] sm:$0xff]
        %v273 = vld [vmem:[#allocation5 + $0x18] sm:$0xff]
        %v274 = vld [vmem:[#allocation5 + $0x20] sm:$0xff]
        %v275 = vld [vmem:[#allocation5 + $0x28] sm:$0xff]
        %v276 = vld [vmem:[#allocation5 + $0x30] sm:$0xff]
        %v277 = vld [vmem:[#allocation5 + $0x38] sm:$0xff]
        %v278 = vld [vmem:[#allocation5 + $0x40] sm:$0xff]
        %v279 = vld [vmem:[#allocation5 + $0x48] sm:$0xff]
        %v280 = vld [vmem:[#allocation5 + $0x50] sm:$0xff]
        %v281 = vld [vmem:[#allocation5 + $0x58] sm:$0xff]
        %v282 = vld [vmem:[#allocation5 + $0x60] sm:$0xff]
        %v283 = vld [vmem:[#allocation5 + $0x68] sm:$0xff]
        %v284 = vld [vmem:[#allocation5 + $0x70] sm:$0xff]
        %v285 = vld [vmem:[#allocation5 + $0x78] sm:$0xff]
        %v286 = vld [vmem:[#allocation5 + $0x80] sm:$0xff]
        %v287 = vld [vmem:[#allocation5 + $0x88] sm:$0xff]
        %v288 = vld [vmem:[#allocation5 + $0x90] sm:$0xff]
        %v289 = vld [vmem:[#allocation5 + $0x98] sm:$0xff]
        %v290 = vld [vmem:[#allocation5 + $0xa0] sm:$0xff]
        %v291 = vld [vmem:[#allocation5 + $0xa8] sm:$0xff]
        %v292 = vld [vmem:[#allocation5 + $0xb0] sm:$0xff]
        %v293 = vld [vmem:[#allocation5 + $0xb8] sm:$0xff]
        %v294 = vld [vmem:[#allocation5 + $0xc0] sm:$0xff]
        %v295 = vld [vmem:[#allocation5 + $0xc8] sm:$0xff]
        %v296 = vld [vmem:[#allocation5 + $0xd0] sm:$0xff]
        %v297 = vld [vmem:[#allocation5 + $0xd8] sm:$0xff]
        %v298 = vld [vmem:[#allocation5 + $0xe0] sm:$0xff]
        %v299 = vld [vmem:[#allocation5 + $0xe8] sm:$0xff]
        %v300 = vld [vmem:[#allocation5 + $0xf0] sm:$0xff]
        %v301 = vld [vmem:[#allocation5 + $0xf8] sm:$0xff]
        %v302 = vld [vmem:[#allocation7] sm:$0xff]
        %v303 = vld [vmem:[#allocation7 + $0x8] sm:$0xff]
        %v304 = vld [vmem:[#allocation7 + $0x10] sm:$0xff]
        %v305 = vld [vmem:[#allocation7 + $0x18] sm:$0xff]
        %v306 = vld [vmem:[#allocation7 + $0x20] sm:$0xff]
        %v307 = vld [vmem:[#allocation7 + $0x28] sm:$0xff]
        %v308 = vld [vmem:[#allocation7 + $0x30] sm:$0xff]
        %v309 = vld [vmem:[#allocation7 + $0x38] sm:$0xff]
        %v310 = vld [vmem:[#allocation7 + $0x40] sm:$0xff]
        %v311 = vld [vmem:[#allocation7 + $0x48] sm:$0xff]
        %v312 = vld [vmem:[#allocation7 + $0x50] sm:$0xff]
        %v313 = vld [vmem:[#allocation7 + $0x58] sm:$0xff]
        %v314 = vld [vmem:[#allocation7 + $0x60] sm:$0xff]
        %v315 = vld [vmem:[#allocation7 + $0x68] sm:$0xff]
        %v316 = vld [vmem:[#allocation7 + $0x70] sm:$0xff]
        %v317 = vld [vmem:[#allocation7 + $0x78] sm:$0xff]
        %v318 = vld [vmem:[#allocation7 + $0x80] sm:$0xff]
        %v319 = vld [vmem:[#allocation7 + $0x88] sm:$0xff]
        %v320 = vld [vmem:[#allocation7 + $0x90] sm:$0xff]
        %v321 = vld [vmem:[#allocation7 + $0x98] sm:$0xff]
        %v322 = vld [vmem:[#allocation7 + $0xa0] sm:$0xff]
        %v323 = vld [vmem:[#allocation7 + $0xa8] sm:$0xff]
        %v324 = vld [vmem:[#allocation7 + $0xb0] sm:$0xff]
        %v325 = vld [vmem:[#allocation7 + $0xb8] sm:$0xff]
        %v326 = vld [vmem:[#allocation7 + $0xc0] sm:$0xff]
        %v327 = vld [vmem:[#allocation7 + $0xc8] sm:$0xff]
        %v328 = vld [vmem:[#allocation7 + $0xd0] sm:$0xff]
        %v329 = vld [vmem:[#allocation7 + $0xd8] sm:$0xff]
        %v330 = vld [vmem:[#allocation7 + $0xe0] sm:$0xff]
        %v331 = vld [vmem:[#allocation7 + $0xe8] sm:$0xff]
        %v332 = vld [vmem:[#allocation7 + $0xf0] sm:$0xff]
        %v333 = vld [vmem:[#allocation7 + $0xf8] sm:$0xff]
        %334 = vmatprep.subr.mxu0 0.0
        %335 = vmatpush1.xpose.msra.mxu0 %v285
        %336 = vmatprep.subr.mxu0 0.0
        %337 = vmatpush1.xpose.msra.mxu0 %v284
        %338 = vmatprep.subr.mxu0 0.0
        %339 = vmatpush1.xpose.msra.mxu0 %v283
        %340 = vmatprep.subr.mxu0 0.0
        %341 = vmatpush1.xpose.msra.mxu0 %v282
        %342 = vmatprep.subr.mxu0 0.0
        %343 = vmatpush1.xpose.msra.mxu0 %v281
        %344 = vmatprep.subr.mxu0 0.0
        %345 = vmatpush1.xpose.msra.mxu0 %v280
        %346 = vmatprep.subr.mxu0 0.0
        %347 = vmatpush1.xpose.msra.mxu0 %v279
        %348 = vmatprep.subr.mxu0 0.0
        %349 = vmatpush1.xpose.msra.mxu0 %v278
        %350 = vmatprep.subr.mxu0 0.0
        %351 = vmatpush1.xpose.msra.mxu0 %v277
        %352 = vmatprep.subr.mxu0 0.0
        %353 = vmatpush1.xpose.msra.mxu0 %v276
        %354 = vmatprep.subr.mxu0 0.0
        %355 = vmatpush1.xpose.msra.mxu0 %v275
        %356 = vmatprep.subr.mxu0 0.0
        %357 = vmatpush1.xpose.msra.mxu0 %v274
        %358 = vmatprep.subr.mxu0 0.0
        %359 = vmatpush1.xpose.msra.mxu0 %v273
        %360 = vmatprep.subr.mxu0 0.0
        %361 = vmatpush1.xpose.msra.mxu0 %v272
        %362 = vmatprep.subr.mxu0 0.0
        %363 = vmatpush1.xpose.msra.mxu0 %v271
        %364 = vmatprep.subr.mxu0 0.0
        %365 = vmatpush1.xpose.msra.mxu0 %v270
        %366 = vmatprep.subr.mxu0 0.0
        %367 = vmatpush2.xpose.msra.mxu0 %v301
        %368 = vmatprep.subr.mxu0 0.0
        %369 = vmatpush2.xpose.msra.mxu0 %v300
        %370 = vmatprep.subr.mxu0 0.0
        %371 = vmatpush2.xpose.msra.mxu0 %v299
        %372 = vmatprep.subr.mxu0 0.0
        %373 = vmatpush2.xpose.msra.mxu0 %v298
        %374 = vmatprep.subr.mxu0 0.0
        %375 = vmatpush2.xpose.msra.mxu0 %v297
        %376 = vmatprep.subr.mxu0 0.0
        %377 = vmatpush2.xpose.msra.mxu0 %v296
        %378 = vmatprep.subr.mxu0 0.0
        %379 = vmatpush2.xpose.msra.mxu0 %v295
        %380 = vmatprep.subr.mxu0 0.0
        %381 = vmatpush2.xpose.msra.mxu0 %v294
        %382 = vmatprep.subr.mxu0 0.0
        %383 = vmatpush2.xpose.msra.mxu0 %v293
        %384 = vmatprep.subr.mxu0 0.0
        %385 = vmatpush2.xpose.msra.mxu0 %v292
        %386 = vmatprep.subr.mxu0 0.0
        %387 = vmatpush2.xpose.msra.mxu0 %v291
        %388 = vmatprep.subr.mxu0 0.0
        %389 = vmatpush2.xpose.msra.mxu0 %v290
        %390 = vmatprep.subr.mxu0 0.0
        %391 = vmatpush2.xpose.msra.mxu0 %v289
        %392 = vmatprep.subr.mxu0 0.0
        %393 = vmatpush2.xpose.msra.mxu0 %v288
        %394 = vmatprep.subr.mxu0 0.0
        %395 = vmatpush2.xpose.msra.mxu0 %v287
        %396 = vmatprep.subr.mxu0 0.0
        %397 = vmatpush2.xpose.msra.mxu0 %v286
        %398 = vmatprep.mubr.f32.mxu0 0.0
        %399 = vmatmul.mubr.f32.gmra.mxu0 %v269
        %v400 = vpop.f32.mrf.mxu0
        %v401 = vadd.f32 0.0, %v400
        %v402 = vpop.f32.mrf.mxu0
        %v403 = vadd.f32 0.0, %v402
        %404 = vdwg.mxu0
        %v405 = vmax.f32 %v401, 0.0
        %v406 = vmax.f32 %v403, 0.0
        %407 = vmatprep.subr.mxu0 %v333
        %408 = vmatpush1.xpose.msra.mxu0 %v332
        %409 = vmatprep.subr.mxu0 %v331
        %410 = vmatpush1.xpose.msra.mxu0 %v330
        %411 = vmatprep.subr.mxu0 %v329
        %412 = vmatpush1.xpose.msra.mxu0 %v328
        %413 = vmatprep.subr.mxu0 %v327
        %414 = vmatpush1.xpose.msra.mxu0 %v326
        %415 = vmatprep.subr.mxu0 %v325
        %416 = vmatpush1.xpose.msra.mxu0 %v324
        %417 = vmatprep.subr.mxu0 %v323
        %418 = vmatpush1.xpose.msra.mxu0 %v322
        %419 = vmatprep.subr.mxu0 %v321
        %420 = vmatpush1.xpose.msra.mxu0 %v320
        %421 = vmatprep.subr.mxu0 %v319
        %422 = vmatpush1.xpose.msra.mxu0 %v318
        %423 = vmatprep.subr.mxu0 %v317
        %424 = vmatpush1.xpose.msra.mxu0 %v316
        %425 = vmatprep.subr.mxu0 %v315
        %426 = vmatpush1.xpose.msra.mxu0 %v314
        %427 = vmatprep.subr.mxu0 %v313
        %428 = vmatpush1.xpose.msra.mxu0 %v312
        %429 = vmatprep.subr.mxu0 %v311
        %430 = vmatpush1.xpose.msra.mxu0 %v310
        %431 = vmatprep.subr.mxu0 %v309
        %432 = vmatpush1.xpose.msra.mxu0 %v308
        %433 = vmatprep.subr.mxu0 %v307
        %434 = vmatpush1.xpose.msra.mxu0 %v306
        %435 = vmatprep.subr.mxu0 %v305
        %436 = vmatpush1.xpose.msra.mxu0 %v304
        %437 = vmatprep.subr.mxu0 %v303
        %438 = vmatpush1.xpose.msra.mxu0 %v302
        %439 = vmatprep.subr.mxu0 0.0
        %440 = vmatpush2.xpose.msra.mxu0 0.0
        %441 = vmatprep.subr.mxu0 0.0
        %442 = vmatpush2.xpose.msra.mxu0 0.0
        %443 = vmatprep.subr.mxu0 0.0
        %444 = vmatpush2.xpose.msra.mxu0 0.0
        %445 = vmatprep.subr.mxu0 0.0
        %446 = vmatpush2.xpose.msra.mxu0 0.0
        %447 = vmatprep.subr.mxu0 0.0
        %448 = vmatpush2.xpose.msra.mxu0 0.0
        %449 = vmatprep.subr.mxu0 0.0
        %450 = vmatpush2.xpose.msra.mxu0 0.0
        %451 = vmatprep.subr.mxu0 0.0
        %452 = vmatpush2.xpose.msra.mxu0 0.0
        %453 = vmatprep.subr.mxu0 0.0
        %454 = vmatpush2.xpose.msra.mxu0 0.0
        %455 = vmatprep.subr.mxu0 0.0
        %456 = vmatpush2.xpose.msra.mxu0 0.0
        %457 = vmatprep.subr.mxu0 0.0
        %458 = vmatpush2.xpose.msra.mxu0 0.0
        %459 = vmatprep.subr.mxu0 0.0
        %460 = vmatpush2.xpose.msra.mxu0 0.0
        %461 = vmatprep.subr.mxu0 0.0
        %462 = vmatpush2.xpose.msra.mxu0 0.0
        %463 = vmatprep.subr.mxu0 0.0
        %464 = vmatpush2.xpose.msra.mxu0 0.0
        %465 = vmatprep.subr.mxu0 0.0
        %466 = vmatpush2.xpose.msra.mxu0 0.0
        %467 = vmatprep.subr.mxu0 0.0
        %468 = vmatpush2.xpose.msra.mxu0 0.0
        %469 = vmatprep.subr.mxu0 0.0
        %470 = vmatpush2.xpose.msra.mxu0 0.0
        %471 = vmatprep.mubr.f32.mxu0 %v406
        %472 = vmatmul.mubr.f32.gmra.mxu0 %v405
        %v473 = vpop.f32.mrf.mxu0
        %v474 = vadd.f32 %v269, %v473
        %v475 = vpop.f32.mrf.mxu0
        %476 = vdwg.mxu0
        %v477 = vld [vmem:[%s3] sm:$0x1]
        %v478 = vld [vmem:[%s4] sm:$0x1]
        %479 = vadd.xlane.f32.xlu0 %v474
        %v480 = vpop.xlane.xlu0 %479
        %v481 = vmul.f32 %v474, %v474
        %482 = vadd.xlane.f32.xlu0 %v481
        %v483 = vpop.xlane.xlu0 %482
        %v484 = vmul.f32 %v480, 0.0078125
        %v485 = vmul.f32 %v483, 0.0078125
        %v486 = vmul.f32 %v484, %v484
        %v487 = vsub.f32 %v485, %v486
        %v488 = vmax.f32 %v487, 0.0
        %v489 = vadd.f32 %v488, 1e-05
        %v490 = vrsqrt.pop %v489
        %v491 = vsub.f32 %v474, %v484
        %v492 = vmul.f32 %v491, %v490
        %v494 = vlaneseq
        %v495 = vshrl.u32 %v494, 7
        %v496 = vsub.s32 0, %v495
        %v497 = vrot.slane %v477, %v496
        %v499 = vmul.f32 %v492, %v497
        %v501 = vlaneseq
        %v502 = vshrl.u32 %v501, 7
        %v503 = vsub.s32 0, %v502
        %v504 = vrot.slane %v478, %v503
        %v506 = vadd.f32 %v499, %v504
        %507 = vst [vmem:[%s268] sm:$0xff] %v506
        %s508 = sand.u32 %s141, 1
        %s509 = scalar_lea.sflag [#allocation4], %s508
        %s510 = sand.u32 %s141, 1
        %s511 = smul.addr %s510, 8
        %s512 = scalar_lea.vmem [#allocation8], %s511
        // Predicated region
        $region53: #{tpu_custom_call.1} parent=39 // pred_check
          %p513 = pneg %p151
        $region54: #{tpu_custom_call.1} parent=39 // pred_check_branch
          %515 = sbr.rel (%p513) target = $region56
        $region55: #{tpu_custom_call.1} parent=39 // pred_region
          %s517 = ssub.s32 128, 128
          %518 = vsyncadd %s509, %s517
          %s519 = smul.addr %s23, 128
          %s520 = scalar_lea.hbm %s5, %s519
          %s522 = sshll.u32 %s512, 4
          %s523 = int_to_ptr.vmem [resolvable:$true] %s522
          %525 = dma.vmem_to_hbm [thread:$0]  %s523, 128, %s520, %s509
        $region56: #{tpu_custom_call.1} parent=39 // pred_fallthru
          _
      $region40: #{tpu_custom_call.1} parent=5 // pred_fallthru
        _
      %p526 = scmp.le.s32.totalorder 2, %s18
      // Predicated region
      $region57: #{tpu_custom_call.1} parent=5 // pred_check
        %p527 = pneg %p526
      $region58: #{tpu_custom_call.1} parent=5 // pred_check_branch
        %529 = sbr.rel (%p527) target = $region60
      $region59: #{tpu_custom_call.1} parent=5 // pred_region
        %s530 = ssub.s32 %s18, 2
        // Predicated region
        $region61: #{tpu_custom_call.1} parent=59 // pred_check
          %p531 = pneg %p157
        $region62: #{tpu_custom_call.1} parent=59 // pred_check_branch
          %533 = sbr.rel (%p531) target = $region64
        $region63: #{tpu_custom_call.1} parent=59 // pred_region
          %s534 = sand.u32 %s142, 1
          %s535 = scalar_lea.sflag [#allocation4], %s534
          %s536 = sand.u32 %s142, 1
          %s537 = smul.addr %s536, 8
          %s538 = scalar_lea.vmem [#allocation8], %s537
          %539 = dma.done %s535, 128
        $region64: #{tpu_custom_call.1} parent=59 // pred_fallthru
          _
      $region60: #{tpu_custom_call.1} parent=5 // pred_fallthru
        _
    $region6: #{tpu_custom_call.1} parent=1 // loop_footer
      %s22 = sadd.s32 1, %s18
    $region7: #{tpu_custom_call.1} parent=1 // loop_footer_branch
      %17 = sbr.rel target = $region3
    $region8: #{tpu_custom_call.1} parent=1 // loop_exit
      _
    %540 = vsyncpa [#allocation3], 1
    %s541 = scalar_lea.sflag [#allocation3], 1
    %542 = vsyncpa %s541, 1
    %543 = vsyncpa [#allocation6], 1
    %544 = vsyncpa [#allocation4], 1
    %s545 = scalar_lea.sflag [#allocation4], 1
    %546 = vsyncpa %s545, 1

</llo_original>
